<compile_context>
chip_gen: v5e
topology: v5e:2x2
jax: 0.10.0
libtpu: 0.0.40
codegen_flags: <defaults>
</compile_context>

<pallas_src>
import jax
import jax.numpy as jnp
from jax.experimental import pallas as pl
from jax.experimental.pallas import tpu as pltpu

INPUT_SIZE = 784
NUM_CLASS = 10


def linear_kernel(x_ref, w_ref, b_ref, o_ref):
    # x_ref: (TM, INPUT_SIZE) bf16, w_ref: (INPUT_SIZE, NUM_CLASS) bf16,
    # b_ref: (1, NUM_CLASS) f32, o_ref: (TM, NUM_CLASS) f32.
    acc = jnp.dot(x_ref[...], w_ref[...], preferred_element_type=jnp.float32)
    o_ref[...] = (acc + b_ref[...]).astype(o_ref.dtype)


def _round_up(n, m):
    return (n + m - 1) // m * m


def _choose_tm(batch, tm_max):
    # Clamp tile to the batch (rounded to the 8-row sublane multiple).
    tm = min(tm_max, _round_up(batch, 8))
    # For large batches keep >=4 grid steps so v7x's two TensorCores both
    # stream and double-buffering stays effective; never drop below 512 rows.
    if batch >= 4 * 512:
        tm = min(tm, max(512, _round_up(pl.cdiv(batch, 4), 8)))
    return tm


def logistic_regression_forward(x, w_t, b, *, tm=4096):
    """y = x @ w_t + b, matching torch.nn.Linear(input_size, num_class).

    x:   (batch, input_size)
    w_t: (input_size, num_class)  -- nn.Linear weight, pre-transposed
    b:   (1, num_class)
    Returns f32 logits of shape (batch, num_class).
    """
    batch, in_dim = x.shape
    out_dim = w_t.shape[1]

    # HBM-read-bound (~5 flops/byte): stream x/w as bf16, accumulate in f32.
    x_lo = x.astype(jnp.bfloat16)
    w_lo = w_t.astype(jnp.bfloat16)
    b_f32 = b.astype(jnp.float32)

    tm = _choose_tm(batch, tm)
    grid = (pl.cdiv(batch, tm),)  # ragged last block handled by Pallas masking

    cost = pl.CostEstimate(
        flops=2 * batch * in_dim * out_dim,
        bytes_accessed=(batch * in_dim * 2          # bf16 x read
                        + in_dim * out_dim * 2      # bf16 weight read
                        + out_dim * 4               # bias read
                        + batch * out_dim * 4),     # f32 logits write
        transcendentals=0,
    )

    out = pl.pallas_call(
        linear_kernel,
        out_shape=jax.ShapeDtypeStruct((batch, out_dim), jnp.float32),
        grid=grid,
        in_specs=[
            pl.BlockSpec((tm, in_dim), lambda i: (i, 0)),       # streamed batch tile
            pl.BlockSpec((in_dim, out_dim), lambda i: (0, 0)),  # resident weight
            pl.BlockSpec((1, out_dim), lambda i: (0, 0)),       # resident bias
        ],
        out_specs=pl.BlockSpec((tm, out_dim), lambda i: (i, 0)),
        compiler_params=pltpu.CompilerParams(
            dimension_semantics=("parallel",),  # independent batch tiles -> megacore on v7x
            vmem_limit_bytes=48 << 20,          # explicit (v5e default scope is 16 MiB), < v7x 64 MiB
        ),
        cost_estimate=cost,
    )(x_lo, w_lo, b_f32)

    return out


def init_params(key, input_size=INPUT_SIZE, num_class=NUM_CLASS):
    # Deterministic init mimicking nn.Linear's default U(-1/sqrt(fan_in), 1/sqrt(fan_in)).
    kw, kb = jax.random.split(key)
    bound = 1.0 / (input_size ** 0.5)
    w = jax.random.uniform(kw, (num_class, input_size), jnp.float32, -bound, bound)
    b = jax.random.uniform(kb, (num_class,), jnp.float32, -bound, bound)
    # Pre-transpose weight for the kernel; keep bias 2D for VMEM layout.
    return w.T, b.reshape(1, num_class)


if __name__ == "__main__":
    key = jax.random.PRNGKey(0)
    k_x, k_p = jax.random.split(key)
    w_t, b = init_params(k_p)

    # Small shape consistent with the module: (batch, 784) -> (batch, 10).
    batch = 8
    x = jax.random.normal(k_x, (batch, INPUT_SIZE), dtype=jnp.float32)
    out = logistic_regression_forward(x, w_t, b)
    jax.block_until_ready(out)

    # Reference using the same bf16 input rounding the kernel applies.
    x_bf = x.astype(jnp.bfloat16).astype(jnp.float32)
    w_bf = w_t.astype(jnp.bfloat16).astype(jnp.float32)
    ref = x_bf @ w_bf + b
    assert out.shape == (batch, NUM_CLASS)
    assert out.dtype == jnp.float32
    assert jnp.allclose(out, ref, atol=2e-3, rtol=2e-3)
    # Loose check against full-f32 math (bf16 activation rounding only).
    assert jnp.allclose(out, x @ w_t + b, atol=5e-2, rtol=5e-2)

    # Exercise the tiled path with a ragged last block (no wrapper padding).
    batch2 = 1000
    x2 = jax.random.normal(k_x, (batch2, INPUT_SIZE), dtype=jnp.float32)
    out2 = logistic_regression_forward(x2, w_t, b, tm=256)  # grid=4, tail block of 232 rows
    jax.block_until_ready(out2)
    ref2 = x2.astype(jnp.bfloat16).astype(jnp.float32) @ w_bf + b
    assert out2.shape == (batch2, NUM_CLASS)
    assert jnp.allclose(out2, ref2, atol=2e-3, rtol=2e-3)

    print("KERNEL_OK")
</pallas_src>

<mosaic_0001>
module attributes {stable_mosaic.version = 11 : i64} {
  func.func @linear_kernel(%arg0: i32, %arg1: memref<8x784xbf16, #tpu.memory_space<vmem>>, %arg2: memref<784x10xbf16, #tpu.memory_space<vmem>>, %arg3: memref<1x10xf32, #tpu.memory_space<vmem>>, %arg4: memref<8x10xf32, #tpu.memory_space<vmem>>) attributes {dimension_semantics = [#tpu.dimension_semantics<parallel>], iteration_bounds = array<i64: 1>, scalar_prefetch = 0 : i64, scratch_operands = 0 : i64, tpu.core_type = #tpu.core_type<tc>, window_params = [{transform_indices = @transform_0, window_bounds = array<i64: 8, 784>}, {pipeline_mode = #tpu.pipeline_mode<synchronous>, transform_indices = @transform_1, window_bounds = array<i64: 784, 10>}, {pipeline_mode = #tpu.pipeline_mode<synchronous>, transform_indices = @transform_2, window_bounds = array<i64: 1, 10>}, {transform_indices = @transform_3, window_bounds = array<i64: 8, 10>}]} {
    %c0 = arith.constant 0 : index
    %c0_0 = arith.constant 0 : index
    %0 = vector.load %arg1[%c0, %c0_0] : memref<8x784xbf16, #tpu.memory_space<vmem>>, vector<8x784xbf16>
    %c0_1 = arith.constant 0 : index
    %c0_2 = arith.constant 0 : index
    %1 = vector.load %arg2[%c0_1, %c0_2] : memref<784x10xbf16, #tpu.memory_space<vmem>>, vector<784x10xbf16>
    %cst = arith.constant dense<0.000000e+00> : vector<8x10xf32>
    %2 = tpu.matmul %0, %1, %cst {dimension_numbers = #tpu.dot_dimension_numbers<[1], [0], [0], [1], [0, 0, 1, 1], [], []>} : vector<8x784xbf16>, vector<784x10xbf16>, vector<8x10xf32> -> vector<8x10xf32>
    %c0_3 = arith.constant 0 : index
    %c0_4 = arith.constant 0 : index
    %3 = vector.load %arg3[%c0_3, %c0_4] : memref<1x10xf32, #tpu.memory_space<vmem>>, vector<1x10xf32>
    %4 = vector.broadcast %3 : vector<1x10xf32> to vector<8x10xf32>
    %5 = arith.addf %2, %4 : vector<8x10xf32>
    %c0_5 = arith.constant 0 : index
    %c0_6 = arith.constant 0 : index
    %6 = vector.load %arg4[%c0_5, %c0_6] : memref<8x10xf32, #tpu.memory_space<vmem>>, vector<8x10xf32>
    tpu.vector_store %arg4[%c0_5, %c0_6], %5 {strides = array<i32>} : memref<8x10xf32, #tpu.memory_space<vmem>>, vector<8x10xf32>,
    return
  }
  func.func @transform_0(%arg0: i32) -> (i32, i32) {
    %c0_i32 = arith.constant 0 : i32
    %c0_i32_0 = arith.constant 0 : i32
    return %arg0, %c0_i32 : i32, i32
  }
  func.func @transform_1(%arg0: i32) -> (i32, i32) {
    %c0_i32 = arith.constant 0 : i32
    %c0_i32_0 = arith.constant 0 : i32
    %c0_i32_1 = arith.constant 0 : i32
    return %c0_i32, %c0_i32_0 : i32, i32
  }
  func.func @transform_2(%arg0: i32) -> (i32, i32) {
    %c0_i32 = arith.constant 0 : i32
    %c0_i32_0 = arith.constant 0 : i32
    %c0_i32_1 = arith.constant 0 : i32
    return %c0_i32, %c0_i32_0 : i32, i32
  }
  func.func @transform_3(%arg0: i32) -> (i32, i32) {
    %c0_i32 = arith.constant 0 : i32
    %c0_i32_0 = arith.constant 0 : i32
    return %arg0, %c0_i32 : i32, i32
  }
}

</mosaic_0001>

<llo_original>
// kernel: tpu_custom_call.1
$region0: #{tpu_custom_call.1}
  #allocation0 [shape = 'u32[]', space=smem, size = 0x4, offset = 0x4, fixed_abs, tag = 'smem constant byte address 0x4 - core index']
  #allocation1 [shape = 'u32[72,128]{1,0:T(1,128)}', space=vmem, size = 0x9000, scoped, tag = 'internal scratch']
  %s0 = inlined_call_operand.vmem [shape: bf16[8,784], index: 0, kind: input, shape index: {}]
  %s1 = inlined_call_operand.vmem [shape: bf16[784,10], index: 1, kind: input, shape index: {}]
  %s2 = inlined_call_operand.vmem [shape: f32[1,10], index: 2, kind: input, shape index: {}]
  %s3 = inlined_call_operand.hbm [shape: f32[8,10], index: 3, kind: output, shape index: {}]
  %s4 = sld [smem:[#allocation0]]
  $region22: #{tpu_custom_call.1} parent=0
    _
  %s6 = ssub.s32 1, %s4
  %s7 = scalar_select 0, %s6, %s4
  $region1: #{tpu_custom_call.1} parent=0
    #allocation2 [shape = 'u8[4096]{0}', space=vmem, size = 0x1000, scoped, tag = 'output window, operand 0, single buffered']
    #allocation3 [shape = 's32[1]{0}', space=sflag, size = 0x4, scoped, tag = 'scoped memory for tpu_custom_call.1']
    %8 = vsyncpa [#allocation3], 0
    // Predicated region
    $region2: #{tpu_custom_call.1} parent=1 // pred_check
      _
    $region3: #{tpu_custom_call.1} parent=1 // pred_check_branch
      %10 = sbr.rel (0) target = $region5
    $region4: #{tpu_custom_call.1} parent=1 // pred_region
      _
    $region5: #{tpu_custom_call.1} parent=1 // pred_fallthru
      _
    // Predicated region
    $region6: #{tpu_custom_call.1} parent=1 // pred_check
      _
    $region7: #{tpu_custom_call.1} parent=1 // pred_check_branch
      %12 = sbr.rel (0) target = $region9
    $region8: #{tpu_custom_call.1} parent=1 // pred_region
      _
    $region9: #{tpu_custom_call.1} parent=1 // pred_fallthru
      _
    // Predicated region
    $region10: #{tpu_custom_call.1} parent=1 // pred_check
      _
    $region11: #{tpu_custom_call.1} parent=1 // pred_check_branch
      %14 = sbr.rel (0) target = $region13
    $region12: #{tpu_custom_call.1} parent=1 // pred_region
      _
    $region13: #{tpu_custom_call.1} parent=1 // pred_fallthru
      _
    %v16 = vld [vmem:[%s0] sm:$0xff]
    %v17 = vld [vmem:[%s0 + $0x8] sm:$0xff]
    %v18 = vld [vmem:[%s0 + $0x10] sm:$0xff]
    %v19 = vld [vmem:[%s0 + $0x18] sm:$0xf]
    %v20 = vld [vmem:[%s1] sm:$0xf]
    %v21 = vld [vmem:[%s1 + $0x4] sm:$0xf]
    %v22 = vld [vmem:[%s1 + $0x8] sm:$0xf]
    %v23 = vld [vmem:[%s1 + $0xc] sm:$0xf]
    %v24 = vld [vmem:[%s1 + $0x10] sm:$0xf]
    %v25 = vld [vmem:[%s1 + $0x14] sm:$0xf]
    %v26 = vld [vmem:[%s1 + $0x18] sm:$0xf]
    %v27 = vld [vmem:[%s1 + $0x1c] sm:$0xf]
    %v28 = vld [vmem:[%s1 + $0x20] sm:$0xf]
    %v29 = vld [vmem:[%s1 + $0x24] sm:$0xf]
    %v30 = vld [vmem:[%s1 + $0x28] sm:$0xf]
    %v31 = vld [vmem:[%s1 + $0x2c] sm:$0xf]
    %v32 = vld [vmem:[%s1 + $0x30] sm:$0xf]
    %v33 = vld [vmem:[%s1 + $0x34] sm:$0xf]
    %v34 = vld [vmem:[%s1 + $0x38] sm:$0xf]
    %v35 = vld [vmem:[%s1 + $0x3c] sm:$0xf]
    %v36 = vld [vmem:[%s1 + $0x40] sm:$0xf]
    %v37 = vld [vmem:[%s1 + $0x44] sm:$0xf]
    %v38 = vld [vmem:[%s1 + $0x48] sm:$0xf]
    %v39 = vld [vmem:[%s1 + $0x4c] sm:$0xf]
    %v40 = vld [vmem:[%s1 + $0x50] sm:$0xf]
    %v41 = vld [vmem:[%s1 + $0x54] sm:$0xf]
    %v42 = vld [vmem:[%s1 + $0x58] sm:$0xf]
    %v43 = vld [vmem:[%s1 + $0x5c] sm:$0xf]
    %v44 = vld [vmem:[%s1 + $0x60] sm:$0xf]
    %v45 = vld [vmem:[%s1 + $0x64] sm:$0xf]
    %v46 = vld [vmem:[%s1 + $0x68] sm:$0xf]
    %v47 = vld [vmem:[%s1 + $0x6c] sm:$0xf]
    %v48 = vld [vmem:[%s1 + $0x70] sm:$0xf]
    %v49 = vld [vmem:[%s1 + $0x74] sm:$0xf]
    %v50 = vld [vmem:[%s1 + $0x78] sm:$0xf]
    %v51 = vld [vmem:[%s1 + $0x7c] sm:$0xf]
    %v52 = vld [vmem:[%s1 + $0x80] sm:$0xf]
    %v53 = vld [vmem:[%s1 + $0x84] sm:$0xf]
    %v54 = vld [vmem:[%s1 + $0x88] sm:$0xf]
    %v55 = vld [vmem:[%s1 + $0x8c] sm:$0xf]
    %v56 = vld [vmem:[%s1 + $0x90] sm:$0xf]
    %v57 = vld [vmem:[%s1 + $0x94] sm:$0xf]
    %v58 = vld [vmem:[%s1 + $0x98] sm:$0xf]
    %v59 = vld [vmem:[%s1 + $0x9c] sm:$0xf]
    %v60 = vld [vmem:[%s1 + $0xa0] sm:$0xf]
    %v61 = vld [vmem:[%s1 + $0xa4] sm:$0xf]
    %v62 = vld [vmem:[%s1 + $0xa8] sm:$0xf]
    %v63 = vld [vmem:[%s1 + $0xac] sm:$0xf]
    %v64 = vld [vmem:[%s1 + $0xb0] sm:$0xf]
    %v65 = vld [vmem:[%s1 + $0xb4] sm:$0xf]
    %v66 = vld [vmem:[%s1 + $0xb8] sm:$0xf]
    %v67 = vld [vmem:[%s1 + $0xbc] sm:$0xf]
    %v68 = vld [vmem:[%s1 + $0xc0] sm:$0xf]
    %v69 = vld [vmem:[%s1 + $0xc4] sm:$0xf]
    %v70 = vld [vmem:[%s1 + $0xc8] sm:$0xf]
    %v71 = vld [vmem:[%s1 + $0xcc] sm:$0xf]
    %v72 = vld [vmem:[%s1 + $0xd0] sm:$0xf]
    %v73 = vld [vmem:[%s1 + $0xd4] sm:$0xf]
    %v74 = vld [vmem:[%s1 + $0xd8] sm:$0xf]
    %v75 = vld [vmem:[%s1 + $0xdc] sm:$0xf]
    %v76 = vld [vmem:[%s1 + $0xe0] sm:$0xf]
    %v77 = vld [vmem:[%s1 + $0xe4] sm:$0xf]
    %v78 = vld [vmem:[%s1 + $0xe8] sm:$0xf]
    %v79 = vld [vmem:[%s1 + $0xec] sm:$0xf]
    %v80 = vld [vmem:[%s1 + $0xf0] sm:$0xf]
    %v81 = vld [vmem:[%s1 + $0xf4] sm:$0xf]
    %v82 = vld [vmem:[%s1 + $0xf8] sm:$0xf]
    %v83 = vld [vmem:[%s1 + $0xfc] sm:$0xf]
    %v84 = vld [vmem:[%s1 + $0x100] sm:$0xf]
    %v85 = vld [vmem:[%s1 + $0x104] sm:$0xf]
    %v86 = vld [vmem:[%s1 + $0x108] sm:$0xf]
    %v87 = vld [vmem:[%s1 + $0x10c] sm:$0xf]
    %v88 = vld [vmem:[%s1 + $0x110] sm:$0xf]
    %v89 = vld [vmem:[%s1 + $0x114] sm:$0xf]
    %v90 = vld [vmem:[%s1 + $0x118] sm:$0xf]
    %v91 = vld [vmem:[%s1 + $0x11c] sm:$0xf]
    %v92 = vld [vmem:[%s1 + $0x120] sm:$0xf]
    %v93 = vld [vmem:[%s1 + $0x124] sm:$0xf]
    %v94 = vld [vmem:[%s1 + $0x128] sm:$0xf]
    %v95 = vld [vmem:[%s1 + $0x12c] sm:$0xf]
    %v96 = vld [vmem:[%s1 + $0x130] sm:$0xf]
    %v97 = vld [vmem:[%s1 + $0x134] sm:$0xf]
    %v98 = vld [vmem:[%s1 + $0x138] sm:$0xf]
    %v99 = vld [vmem:[%s1 + $0x13c] sm:$0xf]
    %v100 = vld [vmem:[%s1 + $0x140] sm:$0xf]
    %v101 = vld [vmem:[%s1 + $0x144] sm:$0xf]
    %v102 = vld [vmem:[%s1 + $0x148] sm:$0xf]
    %v103 = vld [vmem:[%s1 + $0x14c] sm:$0xf]
    %v104 = vld [vmem:[%s1 + $0x150] sm:$0xf]
    %v105 = vld [vmem:[%s1 + $0x154] sm:$0xf]
    %v106 = vld [vmem:[%s1 + $0x158] sm:$0xf]
    %v107 = vld [vmem:[%s1 + $0x15c] sm:$0xf]
    %v108 = vld [vmem:[%s1 + $0x160] sm:$0xf]
    %v109 = vld [vmem:[%s1 + $0x164] sm:$0xf]
    %v110 = vld [vmem:[%s1 + $0x168] sm:$0xf]
    %v111 = vld [vmem:[%s1 + $0x16c] sm:$0xf]
    %v112 = vld [vmem:[%s1 + $0x170] sm:$0xf]
    %v113 = vld [vmem:[%s1 + $0x174] sm:$0xf]
    %v114 = vld [vmem:[%s1 + $0x178] sm:$0xf]
    %v115 = vld [vmem:[%s1 + $0x17c] sm:$0xf]
    %v116 = vld [vmem:[%s1 + $0x180] sm:$0xf]
    %v117 = vld [vmem:[%s1 + $0x184] sm:$0xf]
    %v118 = vld [vmem:[%s2] sm:$0x1]
    %v120 = vperm.slane %v118, 0
    %v126 = vunpack.c.l.b16 %v16
    %v127 = vunpack.c.h.b16 %v16
    %v128 = vunpack.c.l.b16 %v17
    %v129 = vunpack.c.h.b16 %v17
    %v130 = vunpack.c.l.b16 %v18
    %v131 = vunpack.c.h.b16 %v18
    %v132 = vunpack.c.l.b16 %v19
    %v133 = vpack.c.b16 %v126, %v126
    %v134 = vpack.c.b16 %v127, %v127
    %v135 = vpack.c.b16 %v128, %v128
    %v136 = vpack.c.b16 %v129, %v129
    %v137 = vpack.c.b16 %v130, %v130
    %v138 = vpack.c.b16 %v131, %v131
    %v139 = vpack.c.b16 %v132, %v132
    %v244 = vunpack.c.l.b16 %v20
    %v245 = vunpack.c.l.b16 %v21
    %v246 = vunpack.c.l.b16 %v22
    %v247 = vunpack.c.l.b16 %v23
    %v248 = vunpack.c.l.b16 %v24
    %v249 = vunpack.c.l.b16 %v25
    %v250 = vunpack.c.l.b16 %v26
    %v251 = vunpack.c.l.b16 %v27
    %v252 = vunpack.c.l.b16 %v28
    %v253 = vunpack.c.l.b16 %v29
    %v254 = vunpack.c.l.b16 %v30
    %v255 = vunpack.c.l.b16 %v31
    %v256 = vunpack.c.l.b16 %v32
    %v257 = vunpack.c.l.b16 %v33
    %v258 = vunpack.c.l.b16 %v34
    %v259 = vunpack.c.l.b16 %v35
    %v260 = vunpack.c.l.b16 %v36
    %v261 = vunpack.c.l.b16 %v37
    %v262 = vunpack.c.l.b16 %v38
    %v263 = vunpack.c.l.b16 %v39
    %v264 = vunpack.c.l.b16 %v40
    %v265 = vunpack.c.l.b16 %v41
    %v266 = vunpack.c.l.b16 %v42
    %v267 = vunpack.c.l.b16 %v43
    %v268 = vunpack.c.l.b16 %v44
    %v269 = vunpack.c.l.b16 %v45
    %v270 = vunpack.c.l.b16 %v46
    %v271 = vunpack.c.l.b16 %v47
    %v272 = vunpack.c.l.b16 %v48
    %v273 = vunpack.c.l.b16 %v49
    %v274 = vunpack.c.l.b16 %v50
    %v275 = vunpack.c.l.b16 %v51
    %v276 = vunpack.c.l.b16 %v52
    %v277 = vunpack.c.l.b16 %v53
    %v278 = vunpack.c.l.b16 %v54
    %v279 = vunpack.c.l.b16 %v55
    %v280 = vunpack.c.l.b16 %v56
    %v281 = vunpack.c.l.b16 %v57
    %v282 = vunpack.c.l.b16 %v58
    %v283 = vunpack.c.l.b16 %v59
    %v284 = vunpack.c.l.b16 %v60
    %v285 = vunpack.c.l.b16 %v61
    %v286 = vunpack.c.l.b16 %v62
    %v287 = vunpack.c.l.b16 %v63
    %v288 = vunpack.c.l.b16 %v64
    %v289 = vunpack.c.l.b16 %v65
    %v290 = vunpack.c.l.b16 %v66
    %v291 = vunpack.c.l.b16 %v67
    %v292 = vunpack.c.l.b16 %v68
    %v293 = vunpack.c.l.b16 %v69
    %v294 = vunpack.c.l.b16 %v70
    %v295 = vunpack.c.l.b16 %v71
    %v296 = vunpack.c.l.b16 %v72
    %v297 = vunpack.c.l.b16 %v73
    %v298 = vunpack.c.l.b16 %v74
    %v299 = vunpack.c.l.b16 %v75
    %v300 = vunpack.c.l.b16 %v76
    %v301 = vunpack.c.l.b16 %v77
    %v302 = vunpack.c.l.b16 %v78
    %v303 = vunpack.c.l.b16 %v79
    %v304 = vunpack.c.l.b16 %v80
    %v305 = vunpack.c.l.b16 %v81
    %v306 = vunpack.c.l.b16 %v82
    %v307 = vunpack.c.l.b16 %v83
    %v308 = vunpack.c.l.b16 %v84
    %v309 = vunpack.c.l.b16 %v85
    %v310 = vunpack.c.l.b16 %v86
    %v311 = vunpack.c.l.b16 %v87
    %v312 = vunpack.c.l.b16 %v88
    %v313 = vunpack.c.l.b16 %v89
    %v314 = vunpack.c.l.b16 %v90
    %v315 = vunpack.c.l.b16 %v91
    %v316 = vunpack.c.l.b16 %v92
    %v317 = vunpack.c.l.b16 %v93
    %v318 = vunpack.c.l.b16 %v94
    %v319 = vunpack.c.l.b16 %v95
    %v320 = vunpack.c.l.b16 %v96
    %v321 = vunpack.c.l.b16 %v97
    %v322 = vunpack.c.l.b16 %v98
    %v323 = vunpack.c.l.b16 %v99
    %v324 = vunpack.c.l.b16 %v100
    %v325 = vunpack.c.l.b16 %v101
    %v326 = vunpack.c.l.b16 %v102
    %v327 = vunpack.c.l.b16 %v103
    %v328 = vunpack.c.l.b16 %v104
    %v329 = vunpack.c.l.b16 %v105
    %v330 = vunpack.c.l.b16 %v106
    %v331 = vunpack.c.l.b16 %v107
    %v332 = vunpack.c.l.b16 %v108
    %v333 = vunpack.c.l.b16 %v109
    %v334 = vunpack.c.l.b16 %v110
    %v335 = vunpack.c.l.b16 %v111
    %v336 = vunpack.c.l.b16 %v112
    %v337 = vunpack.c.l.b16 %v113
    %v338 = vunpack.c.l.b16 %v114
    %v339 = vunpack.c.l.b16 %v115
    %v340 = vunpack.c.l.b16 %v116
    %v341 = vunpack.c.l.b16 %v117
    %v342 = vpack.c.b16 %v245, %v244
    %v343 = vpack.c.b16 %v247, %v246
    %v344 = vpack.c.b16 %v249, %v248
    %v345 = vpack.c.b16 %v251, %v250
    %v346 = vpack.c.b16 %v253, %v252
    %v347 = vpack.c.b16 %v255, %v254
    %v348 = vpack.c.b16 %v257, %v256
    %v349 = vpack.c.b16 %v259, %v258
    %v350 = vpack.c.b16 %v261, %v260
    %v351 = vpack.c.b16 %v263, %v262
    %v352 = vpack.c.b16 %v265, %v264
    %v353 = vpack.c.b16 %v267, %v266
    %v354 = vpack.c.b16 %v269, %v268
    %v355 = vpack.c.b16 %v271, %v270
    %v356 = vpack.c.b16 %v273, %v272
    %v357 = vpack.c.b16 %v275, %v274
    %v358 = vpack.c.b16 %v277, %v276
    %v359 = vpack.c.b16 %v279, %v278
    %v360 = vpack.c.b16 %v281, %v280
    %v361 = vpack.c.b16 %v283, %v282
    %v362 = vpack.c.b16 %v285, %v284
    %v363 = vpack.c.b16 %v287, %v286
    %v364 = vpack.c.b16 %v289, %v288
    %v365 = vpack.c.b16 %v291, %v290
    %v366 = vpack.c.b16 %v293, %v292
    %v367 = vpack.c.b16 %v295, %v294
    %v368 = vpack.c.b16 %v297, %v296
    %v369 = vpack.c.b16 %v299, %v298
    %v370 = vpack.c.b16 %v301, %v300
    %v371 = vpack.c.b16 %v303, %v302
    %v372 = vpack.c.b16 %v305, %v304
    %v373 = vpack.c.b16 %v307, %v306
    %v374 = vpack.c.b16 %v309, %v308
    %v375 = vpack.c.b16 %v311, %v310
    %v376 = vpack.c.b16 %v313, %v312
    %v377 = vpack.c.b16 %v315, %v314
    %v378 = vpack.c.b16 %v317, %v316
    %v379 = vpack.c.b16 %v319, %v318
    %v380 = vpack.c.b16 %v321, %v320
    %v381 = vpack.c.b16 %v323, %v322
    %v382 = vpack.c.b16 %v325, %v324
    %v383 = vpack.c.b16 %v327, %v326
    %v384 = vpack.c.b16 %v329, %v328
    %v385 = vpack.c.b16 %v331, %v330
    %v386 = vpack.c.b16 %v333, %v332
    %v387 = vpack.c.b16 %v335, %v334
    %v388 = vpack.c.b16 %v337, %v336
    %v389 = vpack.c.b16 %v339, %v338
    %v390 = vpack.c.b16 %v341, %v340
    %vm440 = vcmask 130048
    %v442 = vsel %vm440, %v139, 0
    %444 = vmatpush.bf16.msra.mxu0 %v349
    %445 = vmatpush.bf16.msra.mxu0 %v348
    %446 = vmatpush.bf16.msra.mxu0 %v347
    %447 = vmatpush.bf16.msra.mxu0 %v346
    %448 = vmatpush.bf16.msra.mxu0 %v345
    %449 = vmatpush.bf16.msra.mxu0 %v344
    %450 = vmatpush.bf16.msra.mxu0 %v343
    %451 = vmatpush.bf16.msra.mxu0 %v342
    %452 = vmatmul.bf16.gmra.mxu0 %v133
    %v453 = vpop.f32.mrf.mxu0
    %v454 = vadd.f32 %v120, %v453
    %v455 = vpop.f32.mrf.mxu0
    %456 = vdwg.mxu0
    %457 = vmatpush.bf16.msra.mxu0 %v357
    %458 = vmatpush.bf16.msra.mxu0 %v356
    %459 = vmatpush.bf16.msra.mxu0 %v355
    %460 = vmatpush.bf16.msra.mxu0 %v354
    %461 = vmatpush.bf16.msra.mxu0 %v353
    %462 = vmatpush.bf16.msra.mxu0 %v352
    %463 = vmatpush.bf16.msra.mxu0 %v351
    %464 = vmatpush.bf16.msra.mxu0 %v350
    %465 = vmatmul.bf16.gmra.mxu0 %v134
    %v466 = vpop.f32.mrf.mxu0
    %v467 = vadd.f32 %v454, %v466
    %v468 = vpop.f32.mrf.mxu0
    %469 = vdwg.mxu0
    %470 = vmatpush.bf16.msra.mxu0 %v365
    %471 = vmatpush.bf16.msra.mxu0 %v364
    %472 = vmatpush.bf16.msra.mxu0 %v363
    %473 = vmatpush.bf16.msra.mxu0 %v362
    %474 = vmatpush.bf16.msra.mxu0 %v361
    %475 = vmatpush.bf16.msra.mxu0 %v360
    %476 = vmatpush.bf16.msra.mxu0 %v359
    %477 = vmatpush.bf16.msra.mxu0 %v358
    %478 = vmatmul.bf16.gmra.mxu0 %v135
    %v479 = vpop.f32.mrf.mxu0
    %v480 = vadd.f32 %v467, %v479
    %v481 = vpop.f32.mrf.mxu0
    %482 = vdwg.mxu0
    %483 = vmatpush.bf16.msra.mxu0 %v373
    %484 = vmatpush.bf16.msra.mxu0 %v372
    %485 = vmatpush.bf16.msra.mxu0 %v371
    %486 = vmatpush.bf16.msra.mxu0 %v370
    %487 = vmatpush.bf16.msra.mxu0 %v369
    %488 = vmatpush.bf16.msra.mxu0 %v368
    %489 = vmatpush.bf16.msra.mxu0 %v367
    %490 = vmatpush.bf16.msra.mxu0 %v366
    %491 = vmatmul.bf16.gmra.mxu0 %v136
    %v492 = vpop.f32.mrf.mxu0
    %v493 = vadd.f32 %v480, %v492
    %v494 = vpop.f32.mrf.mxu0
    %495 = vdwg.mxu0
    %496 = vmatpush.bf16.msra.mxu0 %v381
    %497 = vmatpush.bf16.msra.mxu0 %v380
    %498 = vmatpush.bf16.msra.mxu0 %v379
    %499 = vmatpush.bf16.msra.mxu0 %v378
    %500 = vmatpush.bf16.msra.mxu0 %v377
    %501 = vmatpush.bf16.msra.mxu0 %v376
    %502 = vmatpush.bf16.msra.mxu0 %v375
    %503 = vmatpush.bf16.msra.mxu0 %v374
    %504 = vmatmul.bf16.gmra.mxu0 %v137
    %v505 = vpop.f32.mrf.mxu0
    %v506 = vadd.f32 %v493, %v505
    %v507 = vpop.f32.mrf.mxu0
    %508 = vdwg.mxu0
    %509 = vmatpush.bf16.msra.mxu0 %v389
    %510 = vmatpush.bf16.msra.mxu0 %v388
    %511 = vmatpush.bf16.msra.mxu0 %v387
    %512 = vmatpush.bf16.msra.mxu0 %v386
    %513 = vmatpush.bf16.msra.mxu0 %v385
    %514 = vmatpush.bf16.msra.mxu0 %v384
    %515 = vmatpush.bf16.msra.mxu0 %v383
    %516 = vmatpush.bf16.msra.mxu0 %v382
    %517 = vmatmul.bf16.gmra.mxu0 %v138
    %v518 = vpop.f32.mrf.mxu0
    %v519 = vadd.f32 %v506, %v518
    %v520 = vpop.f32.mrf.mxu0
    %521 = vdwg.mxu0
    %522 = vmatpush.bf16.msra.mxu0 0
    %523 = vmatpush.bf16.msra.mxu0 0
    %524 = vmatpush.bf16.msra.mxu0 0
    %525 = vmatpush.bf16.msra.mxu0 0
    %526 = vmatpush.bf16.msra.mxu0 0
    %527 = vmatpush.bf16.msra.mxu0 0
    %528 = vmatpush.bf16.msra.mxu0 0
    %529 = vmatpush.bf16.msra.mxu0 %v390
    %530 = vmatmul.bf16.gmra.mxu0 %v442
    %v531 = vpop.f32.mrf.mxu0
    %v532 = vadd.f32 %v519, %v531
    %v533 = vpop.f32.mrf.mxu0
    %534 = vdwg.mxu0
    %vm535 = vcmask 80896
    %536 = vst.msk [vmem:[#allocation2] sm:$0xff] %vm535, %v532
    // Predicated region
    $region14: #{tpu_custom_call.1} parent=1 // pred_check
      _
    $region15: #{tpu_custom_call.1} parent=1 // pred_check_branch
      %538 = sbr.rel (0) target = $region17
    $region16: #{tpu_custom_call.1} parent=1 // pred_region
      %540 = vsyncadd [#allocation3], 0
      %s542 = sshll.u32 [#allocation2], 4
      %s543 = int_to_ptr.vmem [resolvable:$true] %s542
      %s544 = sshll.u32 %s3, 4
      %s545 = int_to_ptr.hbm [resolvable:$true] %s544
      %547 = dma.vmem_to_hbm [thread:$0]  %s543, 128, %s545, [#allocation3]
    $region17: #{tpu_custom_call.1} parent=1 // pred_fallthru
      _
    // Predicated region
    $region18: #{tpu_custom_call.1} parent=1 // pred_check
      _
    $region19: #{tpu_custom_call.1} parent=1 // pred_check_branch
      %549 = sbr.rel (0) target = $region21
    $region20: #{tpu_custom_call.1} parent=1 // pred_region
      %551 = dma.done [#allocation3], 128
    $region21: #{tpu_custom_call.1} parent=1 // pred_fallthru
      _
    %552 = vsyncpa [#allocation3], 1

</llo_original>
